<compile_context>
chip_gen: v5e
topology: v5e:2x2
jax: 0.10.0
libtpu: 0.0.40
codegen_flags: <defaults>
</compile_context>

<pallas_src>
import functools

import jax
import jax.numpy as jnp
from jax.experimental import pallas as pl
from jax.experimental.pallas import tpu as pltpu


def _tpu_generation():
    """Best-effort chip-generation sniff ('v5' / 'v6' / 'v7' / '')."""
    try:
        kind = jax.devices()[0].device_kind.lower()
    except Exception:
        kind = ""
    for tag in ("v7", "v6", "v5", "v4"):
        if tag in kind:
            return tag
    return ""


def _tile_config():
    """Return (tile bytes per input per buffer, leading parallel partitions)."""
    gen = _tpu_generation()
    if gen == "v7":
        # 2 TensorCores/chip, 64 MiB VMEM/TC: 2 in x 2 buf x 8 MiB = 32 MiB.
        return 8 << 20, 2
    if gen == "v6":
        # 1 TC, 128 MiB VMEM: larger tiles amortize the ~0.35 us/step overhead.
        return 6 << 20, 1
    if gen == "v5":
        # 16 MiB default scoped VMEM: 2 x 2 x 3 MiB = 12 MiB stays under it.
        return 3 << 20, 1
    # Unknown / future chip: conservative tile, allow two cores (harmless on 1 TC).
    return 3 << 20, 2


def _smooth_l1_sum(p, t, beta):
    """f32 sum of smooth-L1 per-element losses (plain jnp, for tiny tails)."""
    diff = p.astype(jnp.float32) - t.astype(jnp.float32)
    absd = jnp.abs(diff)
    return jnp.sum(jnp.where(absd < beta, (0.5 / beta) * diff * diff,
                             absd - 0.5 * beta))


def _smooth_l1_kernel(p_ref, t_ref, o_ref, acc_ref, *,
                      n_rows, tile_rows, num_tiles, tiles_per_part,
                      num_parts, beta):
    part = pl.program_id(0)
    j = pl.program_id(1)
    tile_idx = part * tiles_per_part + j

    @pl.when(j == 0)
    def _():
        acc_ref[...] = jnp.zeros(acc_ref.shape, acc_ref.dtype)

    half_over_beta = 0.5 / beta          # constant-folded; no vector divide
    half_beta = 0.5 * beta

    def per_elem_loss():
        # Cast on load (VPU filler under the DMA); no wrapper-side upcast.
        diff = p_ref[...].astype(jnp.float32) - t_ref[...].astype(jnp.float32)
        absd = jnp.abs(diff)
        return jnp.where(absd < beta, half_over_beta * diff * diff,
                         absd - half_beta)

    def accumulate(pe):
        # Fold rows into the (8, lane) accumulator with plain VALU adds; the
        # sublane+lane cross-reduce happens once, in the finalize branch.
        acc_ref[...] += jnp.sum(pe.reshape(tile_rows // 8, 8, -1), axis=0)

    has_ragged_tail = (n_rows % tile_rows) != 0                 # static
    has_dup_tiles = (num_parts * tiles_per_part) != num_tiles   # static

    if has_ragged_tail:
        @pl.when(tile_idx < num_tiles - 1)
        def _():
            accumulate(per_elem_loss())

        @pl.when(tile_idx == num_tiles - 1)
        def _():
            pe = per_elem_loss()
            row_ids = (num_tiles - 1) * tile_rows + jax.lax.broadcasted_iota(
                jnp.int32, pe.shape, 0)
            # Elementwise select BEFORE the sum so garbage rows (clamped /
            # out-of-range DMA data, possibly inf/NaN) are discarded.
            accumulate(jnp.where(row_ids < n_rows, pe, 0.0))
    elif has_dup_tiles:
        @pl.when(tile_idx < num_tiles)
        def _():
            accumulate(per_elem_loss())
    else:
        accumulate(per_elem_loss())

    @pl.when(j == pl.num_programs(1) - 1)
    def _():
        o_ref[...] = jnp.sum(acc_ref[...]).reshape(1, 1, 1)


def smooth_l1_loss_pallas(predict, target, beta=1.0, *, _tile_bytes=None):
    assert predict.ndim == 3 and target.ndim == 3
    assert predict.shape == target.shape
    # TODO(synk): PyTorch special-cases beta == 0 as pure L1; require beta > 0.
    assert beta > 0.0
    n, h, w = predict.shape
    total = n * h * w

    itemsize = jnp.dtype(predict.dtype).itemsize
    # Sublane-packing multiple of the input dtype: f32 -> 8, bf16 -> 16, i8 -> 32.
    pack = max(8, 32 // max(1, itemsize))

    flat_p = predict.reshape(-1)
    flat_t = target.reshape(-1)

    # Lane-dense 2-D view.  Prefer a wide 128-multiple dividing `total`
    # exactly (free reshape, no remainder); otherwise stream the 128-aligned
    # prefix through the kernel and fold the (<128-elem) remainder with jnp.
    lane = None
    for cand in (1024, 512, 256, 128):
        if total % cand == 0 and (total // cand) >= pack:
            lane = cand
            break
    if lane is not None:
        main = total
    elif total >= pack * 128:
        lane = 128
        main = (total // 128) * 128
    else:
        # Degenerate tiny input: less than one (pack, 128) tile of data.
        return _smooth_l1_sum(flat_p, flat_t, beta) / jnp.float32(total)

    rows = main // lane
    p2d = (flat_p if main == total else flat_p[:main]).reshape(rows, lane)
    t2d = (flat_t if main == total else flat_t[:main]).reshape(rows, lane)

    tile_bytes, num_parts = _tile_config()
    if _tile_bytes is not None:
        tile_bytes = _tile_bytes
    tile_rows = max(pack, (tile_bytes // (itemsize * lane)) // pack * pack)
    tile_rows = min(tile_rows, (rows // pack) * pack)

    num_tiles = pl.cdiv(rows, tile_rows)
    num_parts = max(1, min(num_parts, num_tiles))
    tiles_per_part = pl.cdiv(num_tiles, num_parts)

    def in_index_map(p, j):
        # Clamp so the DMA block stays in bounds; duplicate / tail blocks are
        # handled inside the kernel (pl.when skip + row masking).
        return (jnp.minimum(p * tiles_per_part + j, num_tiles - 1), 0)

    kernel = functools.partial(
        _smooth_l1_kernel,
        n_rows=rows, tile_rows=tile_rows, num_tiles=num_tiles,
        tiles_per_part=tiles_per_part, num_parts=num_parts, beta=float(beta))

    # 2 inputs x 2 pipeline buffers x tile, plus accumulator/output headroom.
    vmem_limit = 4 * tile_rows * lane * itemsize + (4 << 20)

    partials = pl.pallas_call(
        kernel,
        out_shape=jax.ShapeDtypeStruct((num_parts, 1, 1), jnp.float32),
        grid=(num_parts, tiles_per_part),
        in_specs=[
            pl.BlockSpec((tile_rows, lane), in_index_map),
            pl.BlockSpec((tile_rows, lane), in_index_map),
        ],
        out_specs=pl.BlockSpec((1, 1, 1), lambda p, j: (p, 0, 0)),
        scratch_shapes=[pltpu.VMEM((8, lane), jnp.float32)],
        compiler_params=pltpu.CompilerParams(
            dimension_semantics=("parallel", "arbitrary"),
            vmem_limit_bytes=int(vmem_limit)),
        cost_estimate=pl.CostEstimate(
            flops=5 * main,
            transcendentals=0,
            bytes_accessed=2 * main * itemsize + num_parts * 4),
    )(p2d, t2d)

    # reduction='mean': sum per-partition partials (+ ragged remainder) and
    # divide in the wrapper so per-core partials stay independent for megacore.
    loss_sum = jnp.sum(partials)
    if main != total:
        loss_sum = loss_sum + _smooth_l1_sum(flat_p[main:], flat_t[main:], beta)
    return loss_sum / jnp.float32(total)


class CrossEntropy2dPallas:
    """Mirror of the PyTorch module's constructor signature and forward."""

    def __init__(self, size_average=True, ignore_label=255):
        # TODO(synk): ignore_label / size_average / weight are unused by the
        # reference forward (it calls smooth_l1_loss directly); stored only.
        self.size_average = size_average
        self.ignore_label = ignore_label

    def __call__(self, predict, target, weight=None):
        return smooth_l1_loss_pallas(predict, target)


def _reference_smooth_l1(predict, target, beta=1.0):
    diff = predict.astype(jnp.float32) - target.astype(jnp.float32)
    absd = jnp.abs(diff)
    per_elem = jnp.where(absd < beta, (0.5 / beta) * diff * diff,
                         absd - 0.5 * beta)
    return jnp.mean(per_elem)


if __name__ == "__main__":
    key = jax.random.PRNGKey(0)
    k1, k2, k3, k4, k5, k6, k7, k8 = jax.random.split(key, 8)
    loss_fn = CrossEntropy2dPallas(size_average=True, ignore_label=255)

    # 1) 128-aligned (n, h, w): exact lane-dense reshape, single-tile kernel.
    p1 = jax.random.normal(k1, (2, 16, 64), dtype=jnp.float32)
    t1 = jax.random.normal(k2, (2, 16, 64), dtype=jnp.float32)
    l1 = loss_fn(p1, t1)
    jax.block_until_ready(l1)
    r1 = _reference_smooth_l1(p1, t1)
    assert jnp.allclose(l1, r1, rtol=1e-5, atol=1e-6), (l1, r1)

    # 2) Ragged element count: 128-aligned prefix in-kernel + jnp remainder,
    #    multi-tile grid with tail-row masking.
    p2 = jax.random.normal(k3, (3, 37, 29), dtype=jnp.float32)
    t2 = jax.random.normal(k4, (3, 37, 29), dtype=jnp.float32)
    l2 = loss_fn(p2, t2)
    jax.block_until_ready(l2)
    r2 = _reference_smooth_l1(p2, t2)
    assert jnp.allclose(l2, r2, rtol=1e-5, atol=1e-6), (l2, r2)

    # 3) bf16 inputs: native-dtype DMA + cast-on-load, 16-row sublane packing.
    p3 = jax.random.normal(k5, (2, 32, 64), dtype=jnp.bfloat16)
    t3 = jax.random.normal(k6, (2, 32, 64), dtype=jnp.bfloat16)
    l3 = smooth_l1_loss_pallas(p3, t3)
    jax.block_until_ready(l3)
    r3 = _reference_smooth_l1(p3, t3)
    assert jnp.allclose(l3, r3, rtol=1e-4, atol=1e-5), (l3, r3)

    # 4) Forced-small tiles: exercise the multi-step pipeline + accumulator.
    p4 = jax.random.normal(k7, (8, 64, 128), dtype=jnp.float32)
    t4 = jax.random.normal(k8, (8, 64, 128), dtype=jnp.float32)
    l4 = smooth_l1_loss_pallas(p4, t4, _tile_bytes=64 * 1024)
    jax.block_until_ready(l4)
    r4 = _reference_smooth_l1(p4, t4)
    assert jnp.allclose(l4, r4, rtol=1e-5, atol=1e-6), (l4, r4)

    # 5) Degenerate tiny input (pure-jnp fallback path).
    p5 = jax.random.normal(k1, (3, 7, 5), dtype=jnp.float32)
    t5 = jax.random.normal(k2, (3, 7, 5), dtype=jnp.float32)
    l5 = loss_fn(p5, t5)
    jax.block_until_ready(l5)
    r5 = _reference_smooth_l1(p5, t5)
    assert jnp.allclose(l5, r5, rtol=1e-5, atol=1e-6), (l5, r5)

    print("KERNEL_OK")
</pallas_src>

<mosaic_0001>
module attributes {stable_mosaic.version = 11 : i64} {
  func.func @_smooth_l1_kernel(%arg0: i32, %arg1: i32, %arg2: memref<8x256xf32, #tpu.memory_space<vmem>>, %arg3: memref<8x256xf32, #tpu.memory_space<vmem>>, %arg4: memref<1x1x1xf32, #tpu.memory_space<vmem>>, %arg5: memref<8x256xf32, #tpu.memory_space<vmem>>) attributes {dimension_semantics = [#tpu.dimension_semantics<parallel>, #tpu.dimension_semantics<arbitrary>], iteration_bounds = array<i64: 1, 1>, scalar_prefetch = 0 : i64, scratch_operands = 1 : i64, tpu.core_type = #tpu.core_type<tc>, window_params = [{transform_indices = @transform_0, window_bounds = array<i64: 8, 256>}, {transform_indices = @transform_1, window_bounds = array<i64: 8, 256>}, {transform_indices = @transform_2, window_bounds = array<i64: 1, 1, 1>}]} {
    %c0_i32 = arith.constant 0 : i32
    %0 = arith.cmpi eq, %arg1, %c0_i32 : i32
    %1 = arith.extui %0 : i1 to i32
    %c0_i32_0 = arith.constant 0 : i32
    %2 = arith.cmpi ne, %1, %c0_i32_0 : i32
    scf.if %2 {
      %cst_13 = arith.constant 0.000000e+00 : f32
      %23 = vector.broadcast %cst_13 : f32 to vector<8x256xf32>
      %c0_14 = arith.constant 0 : index
      %c0_15 = arith.constant 0 : index
      %24 = vector.load %arg5[%c0_14, %c0_15] : memref<8x256xf32, #tpu.memory_space<vmem>>, vector<8x256xf32>
      tpu.vector_store %arg5[%c0_14, %c0_15], %23 {strides = array<i32>} : memref<8x256xf32, #tpu.memory_space<vmem>>, vector<8x256xf32>,
    } else {
    }
    %c0 = arith.constant 0 : index
    %c0_1 = arith.constant 0 : index
    %3 = vector.load %arg2[%c0, %c0_1] : memref<8x256xf32, #tpu.memory_space<vmem>>, vector<8x256xf32>
    %c0_2 = arith.constant 0 : index
    %c0_3 = arith.constant 0 : index
    %4 = vector.load %arg3[%c0_2, %c0_3] : memref<8x256xf32, #tpu.memory_space<vmem>>, vector<8x256xf32>
    %5 = arith.subf %3, %4 : vector<8x256xf32>
    %6 = math.absf %5 : vector<8x256xf32>
    %cst = arith.constant 1.000000e+00 : f32
    %7 = vector.broadcast %cst : f32 to vector<8x256xf32>
    %8 = arith.cmpf olt, %6, %7 : vector<8x256xf32>
    %cst_4 = arith.constant 5.000000e-01 : f32
    %9 = vector.broadcast %cst_4 : f32 to vector<8x256xf32>
    %10 = arith.mulf %9, %5 : vector<8x256xf32>
    %11 = arith.mulf %10, %5 : vector<8x256xf32>
    %cst_5 = arith.constant 5.000000e-01 : f32
    %12 = vector.broadcast %cst_5 : f32 to vector<8x256xf32>
    %13 = arith.subf %6, %12 : vector<8x256xf32>
    %14 = arith.select %8, %11, %13 : vector<8x256xi1>, vector<8x256xf32>
    %c0_6 = arith.constant 0 : index
    %c0_7 = arith.constant 0 : index
    %15 = vector.load %arg5[%c0_6, %c0_7] : memref<8x256xf32, #tpu.memory_space<vmem>>, vector<8x256xf32>
    %16 = vector.shape_cast %14 : vector<8x256xf32> to vector<1x8x256xf32>
    %cst_8 = arith.constant dense<0.000000e+00> : vector<8x256xf32>
    %17 = vector.multi_reduction <add>, %16, %cst_8 [0] : vector<1x8x256xf32> to vector<8x256xf32>
    %18 = arith.addf %15, %17 : vector<8x256xf32>
    %c0_9 = arith.constant 0 : index
    %c0_10 = arith.constant 0 : index
    %19 = vector.load %arg5[%c0_9, %c0_10] : memref<8x256xf32, #tpu.memory_space<vmem>>, vector<8x256xf32>
    tpu.vector_store %arg5[%c0_9, %c0_10], %18 {strides = array<i32>} : memref<8x256xf32, #tpu.memory_space<vmem>>, vector<8x256xf32>,
    %c0_i32_11 = arith.constant 0 : i32
    %20 = arith.cmpi eq, %arg1, %c0_i32_11 : i32
    %21 = arith.extui %20 : i1 to i32
    %c0_i32_12 = arith.constant 0 : i32
    %22 = arith.cmpi ne, %21, %c0_i32_12 : i32
    scf.if %22 {
      %c0_13 = arith.constant 0 : index
      %c0_14 = arith.constant 0 : index
      %23 = vector.load %arg5[%c0_13, %c0_14] : memref<8x256xf32, #tpu.memory_space<vmem>>, vector<8x256xf32>
      %24 = vector.shape_cast %23 : vector<8x256xf32> to vector<1x8x256xf32>
      %cst_15 = arith.constant dense<0.000000e+00> : vector<1xf32>
      %25 = vector.multi_reduction <add>, %24, %cst_15 [1, 2] : vector<1x8x256xf32> to vector<1xf32>
      %26 = vector.shape_cast %25 : vector<1xf32> to vector<1x1x1xf32>
      %27 = vector.extract %26[0, 0, 0] : f32 from vector<1x1x1xf32>
      %28 = vector.broadcast %27 : f32 to vector<1x1x1xf32>
      %c0_16 = arith.constant 0 : index
      %c0_17 = arith.constant 0 : index
      %c0_18 = arith.constant 0 : index
      %29 = vector.load %arg4[%c0_16, %c0_17, %c0_18] : memref<1x1x1xf32, #tpu.memory_space<vmem>>, vector<1x1x1xf32>
      tpu.vector_store %arg4[%c0_16, %c0_17, %c0_18], %28 {strides = array<i32>} : memref<1x1x1xf32, #tpu.memory_space<vmem>>, vector<1x1x1xf32>,
    } else {
    }
    return
  }
  func.func @transform_0(%arg0: i32, %arg1: i32) -> (i32, i32) {
    %c1_i32 = arith.constant 1 : i32
    %0 = arith.muli %arg0, %c1_i32 : i32
    %1 = arith.addi %0, %arg1 : i32
    %c0_i32 = arith.constant 0 : i32
    %2 = arith.minsi %1, %c0_i32 : i32
    %c0_i32_0 = arith.constant 0 : i32
    %c0_i32_1 = arith.constant 0 : i32
    return %2, %c0_i32_0 : i32, i32
  }
  func.func @transform_1(%arg0: i32, %arg1: i32) -> (i32, i32) {
    %c1_i32 = arith.constant 1 : i32
    %0 = arith.muli %arg0, %c1_i32 : i32
    %1 = arith.addi %0, %arg1 : i32
    %c0_i32 = arith.constant 0 : i32
    %2 = arith.minsi %1, %c0_i32 : i32
    %c0_i32_0 = arith.constant 0 : i32
    %c0_i32_1 = arith.constant 0 : i32
    return %2, %c0_i32_0 : i32, i32
  }
  func.func @transform_2(%arg0: i32, %arg1: i32) -> (i32, i32, i32) {
    %c0_i32 = arith.constant 0 : i32
    %c0_i32_0 = arith.constant 0 : i32
    %c0_i32_1 = arith.constant 0 : i32
    return %arg0, %c0_i32, %c0_i32_0 : i32, i32, i32
  }
}

</mosaic_0001>

<llo_original>
// kernel: tpu_custom_call.1
$region0: #{tpu_custom_call.1}
  #allocation0 [shape = 'u32[]', space=smem, size = 0x4, offset = 0x4, fixed_abs, tag = 'smem constant byte address 0x4 - core index']
  #allocation1 [shape = 'u32[72,128]{1,0:T(1,128)}', space=vmem, size = 0x9000, scoped, tag = 'internal scratch']
  #allocation2 [shape = 'f32[8,256]{1,0:T(8,128)}', space=vmem, size = 0x2000, scoped, tag = 'scratch operand']
  %s0 = inlined_call_operand.hbm [shape: f32[8,256], index: 0, kind: input, shape index: {}]
  %s1 = inlined_call_operand.hbm [shape: f32[8,256], index: 1, kind: input, shape index: {}]
  %s2 = inlined_call_operand.hbm [shape: f32[1,1,1], index: 2, kind: output, shape index: {}]
  %s3 = sld [smem:[#allocation0]]
  $region34: #{tpu_custom_call.1} parent=0
    _
  %s5 = ssub.s32 1, %s3
  %s6 = scalar_select 0, %s5, %s3
  $region1: #{tpu_custom_call.1} parent=0
    #allocation3 [shape = 'u8[8192]{0}', space=vmem, size = 0x2000, scoped, tag = 'input window, operand 0, single buffered']
    #allocation4 [shape = 's32[1]{0}', space=sflag, size = 0x4, scoped, tag = 'scoped memory for tpu_custom_call.1']
    #allocation5 [shape = 's32[1]{0}', space=sflag, size = 0x4, scoped, tag = 'scoped memory for tpu_custom_call.1']
    #allocation6 [shape = 'u8[8192]{0}', space=vmem, size = 0x2000, scoped, tag = 'input window, operand 1, single buffered']
    #allocation7 [shape = 's32[1]{0}', space=sflag, size = 0x4, scoped, tag = 'scoped memory for tpu_custom_call.1']
    #allocation8 [shape = 'u8[512]{0}', space=vmem, size = 0x400, scoped, tag = 'output window, operand 0, single buffered']
    %7 = vsyncpa [#allocation4], 0
    %8 = vsyncpa [#allocation7], 0
    %9 = vsyncpa [#allocation5], 0
    // Predicated region
    $region2: #{tpu_custom_call.1} parent=1 // pred_check
      _
    $region3: #{tpu_custom_call.1} parent=1 // pred_check_branch
      %11 = sbr.rel (0) target = $region5
    $region4: #{tpu_custom_call.1} parent=1 // pred_region
      %s12 = sadd.s32 0, 0
      %p13 = scmp.lt.s32.totalorder %s12, 0
      %s14 = scalar_select %p13, %s12, 0
      %16 = vsyncadd [#allocation4], 0
      %s17 = smul.addr %s14, 2
      %s18 = smul.addr %s17, 8
      %s19 = scalar_lea.hbm %s0, %s18
      %s21 = sshll.u32 %s19, 4
      %s22 = int_to_ptr.hbm [resolvable:$true] %s21
      %s23 = sshll.u32 [#allocation3], 4
      %s24 = int_to_ptr.vmem [resolvable:$true] %s23
      %26 = dma.hbm_to_vmem [thread:$0]  %s22, 256, %s24, [#allocation4]
    $region5: #{tpu_custom_call.1} parent=1 // pred_fallthru
      _
    // Predicated region
    $region6: #{tpu_custom_call.1} parent=1 // pred_check
      _
    $region7: #{tpu_custom_call.1} parent=1 // pred_check_branch
      %28 = sbr.rel (0) target = $region9
    $region8: #{tpu_custom_call.1} parent=1 // pred_region
      %s29 = sadd.s32 0, 0
      %p30 = scmp.lt.s32.totalorder %s29, 0
      %s31 = scalar_select %p30, %s29, 0
      %33 = vsyncadd [#allocation7], 0
      %s34 = smul.addr %s31, 2
      %s35 = smul.addr %s34, 8
      %s36 = scalar_lea.hbm %s1, %s35
      %s38 = sshll.u32 %s36, 4
      %s39 = int_to_ptr.hbm [resolvable:$true] %s38
      %s40 = sshll.u32 [#allocation6], 4
      %s41 = int_to_ptr.vmem [resolvable:$true] %s40
      %43 = dma.hbm_to_vmem [thread:$0]  %s39, 256, %s41, [#allocation7]
    $region9: #{tpu_custom_call.1} parent=1 // pred_fallthru
      _
    // Predicated region
    $region10: #{tpu_custom_call.1} parent=1 // pred_check
      _
    $region11: #{tpu_custom_call.1} parent=1 // pred_check_branch
      %45 = sbr.rel (0) target = $region13
    $region12: #{tpu_custom_call.1} parent=1 // pred_region
      %47 = dma.done [#allocation4], 256
    $region13: #{tpu_custom_call.1} parent=1 // pred_fallthru
      _
    // Predicated region
    $region14: #{tpu_custom_call.1} parent=1 // pred_check
      _
    $region15: #{tpu_custom_call.1} parent=1 // pred_check_branch
      %49 = sbr.rel (0) target = $region17
    $region16: #{tpu_custom_call.1} parent=1 // pred_region
      %51 = dma.done [#allocation7], 256
    $region17: #{tpu_custom_call.1} parent=1 // pred_fallthru
      _
    %s52 = sadd.s32 0, 0
    %p53 = scmp.lt.s32.totalorder %s52, 0
    %s54 = scalar_select %p53, %s52, 0
    %s55 = sadd.s32 0, 0
    %p56 = scmp.lt.s32.totalorder %s55, 0
    %s57 = scalar_select %p56, %s55, 0
    %p58 = scmp.eq.s32.totalorder 0, 0
    // Predicated region
    $region18: #{tpu_custom_call.1} parent=1 // pred_check
      %p59 = pneg %p58
    $region19: #{tpu_custom_call.1} parent=1 // pred_check_branch
      %61 = sbr.rel (%p59) target = $region21
    $region20: #{tpu_custom_call.1} parent=1 // pred_region
      %62 = vst [vmem:[#allocation2] sm:$0xff] 0.0
      %63 = vst [vmem:[#allocation2 + $0x8] sm:$0xff] 0.0
    $region21: #{tpu_custom_call.1} parent=1 // pred_fallthru
      _
    %v64 = vld [vmem:[#allocation3] sm:$0xff]
    %v65 = vld [vmem:[#allocation3 + $0x8] sm:$0xff]
    %v66 = vld [vmem:[#allocation6] sm:$0xff]
    %v67 = vld [vmem:[#allocation6 + $0x8] sm:$0xff]
    %v68 = vsub.f32 %v64, %v66
    %v69 = vsub.f32 %v65, %v67
    %v70 = vand.u32 2147483647, %v68
    %v71 = vand.u32 2147483647, %v69
    %vm72 = vcmp.lt.f32.partialorder %v70, 1.0
    %vm73 = vcmp.lt.f32.partialorder %v71, 1.0
    %v74 = vmul.f32 %v68, 0.5
    %v75 = vmul.f32 %v69, 0.5
    %v76 = vmul.f32 %v74, %v68
    %v77 = vmul.f32 %v75, %v69
    %v78 = vsub.f32 %v70, 0.5
    %v79 = vsub.f32 %v71, 0.5
    %v80 = vsel %vm72, %v76, %v78
    %v81 = vsel %vm73, %v77, %v79
    %v82 = vld [vmem:[#allocation2] sm:$0xff]
    %v83 = vld [vmem:[#allocation2 + $0x8] sm:$0xff]
    %v84 = vadd.f32 %v80, 0.0
    %v85 = vadd.f32 %v81, 0.0
    %v86 = vadd.f32 %v82, %v84
    %v87 = vadd.f32 %v83, %v85
    %88 = vst [vmem:[#allocation2] sm:$0xff] %v86
    %89 = vst [vmem:[#allocation2 + $0x8] sm:$0xff] %v87
    // Predicated region
    $region22: #{tpu_custom_call.1} parent=1 // pred_check
      %p90 = pneg %p58
    $region23: #{tpu_custom_call.1} parent=1 // pred_check_branch
      %92 = sbr.rel (%p90) target = $region25
    $region24: #{tpu_custom_call.1} parent=1 // pred_region
      %v93 = vld [vmem:[#allocation2] sm:$0xff]
      %v94 = vld [vmem:[#allocation2 + $0x8] sm:$0xff]
      %v95 = vadd.f32 %v93, %v94
      %96 = vadd.xlane.f32.xlu0 %v95
      %v97 = vpop.xlane.xlu0 %96
      %v98 = vrot.slane %v97, 4
      %v99 = vadd.f32 %v97, %v98
      %v100 = vrot.slane %v99, 2
      %v101 = vadd.f32 %v99, %v100
      %v102 = vrot.slane %v101, 1
      %v103 = vadd.f32 %v101, %v102
      %s104 = vtos %v103
      %v105 = vstv %s104
      %vm106 = vcmask 0
      %107 = vst.msk [vmem:[#allocation8] sm:$0x1] %vm106, %v105
    $region25: #{tpu_custom_call.1} parent=1 // pred_fallthru
      _
    // Predicated region
    $region26: #{tpu_custom_call.1} parent=1 // pred_check
      _
    $region27: #{tpu_custom_call.1} parent=1 // pred_check_branch
      %109 = sbr.rel (0) target = $region29
    $region28: #{tpu_custom_call.1} parent=1 // pred_region
      %111 = vsyncadd [#allocation5], 0
      %s113 = sshll.u32 [#allocation8], 4
      %s114 = int_to_ptr.vmem [resolvable:$true] %s113
      %s115 = sshll.u32 %s2, 4
      %s116 = int_to_ptr.hbm [resolvable:$true] %s115
      %118 = dma.vmem_to_hbm [thread:$0]  %s114, 16, %s116, [#allocation5]
    $region29: #{tpu_custom_call.1} parent=1 // pred_fallthru
      _
    // Predicated region
    $region30: #{tpu_custom_call.1} parent=1 // pred_check
      _
    $region31: #{tpu_custom_call.1} parent=1 // pred_check_branch
      %120 = sbr.rel (0) target = $region33
    $region32: #{tpu_custom_call.1} parent=1 // pred_region
      %122 = dma.done [#allocation5], 16
    $region33: #{tpu_custom_call.1} parent=1 // pred_fallthru
      _
    %123 = vsyncpa [#allocation4], 1
    %124 = vsyncpa [#allocation7], 1
    %125 = vsyncpa [#allocation5], 1

</llo_original>
